<compile_context>
chip_gen: v5e
topology: v5e:2x2
jax: 0.10.0
libtpu: 0.0.40
codegen_flags: <defaults>
</compile_context>

<pallas_src>
import functools

import jax
import jax.numpy as jnp
from jax import lax
from jax.experimental import pallas as pl
from jax.experimental.pallas import tpu as pltpu


# ----------------------------- Pallas kernel ------------------------------- #
def gru_encoder_kernel(x_ref, wih_ref, whh_ref, bih_ref, bhh_ref,
                       h_out_ref, i_scr, *, seq_len, batch):
    """Whole GRU recurrence in one kernel invocation (no time grid).

    x_ref    : (S*B, E) f32  embedded tokens, time-major rows (row = t*B + b)
    wih_ref  : (E, 3H) f32   input->hidden weights, gates (r|z|n) concat on lanes
    whh_ref  : (H, 3H) f32   hidden->hidden weights, gates (r|z|n) concat on lanes
    bih_ref  : (1, 3H) f32   input biases
    bhh_ref  : (1, 3H) f32   hidden biases
    h_out_ref: (1, B, H) f32 final hidden state (== PyTorch GRU `hidden`)
    i_scr    : (S*B, 3H) f32 VMEM scratch with precomputed input projections
    """
    B = batch
    H = whh_ref.shape[0]

    # ---- Prologue: hoist all input projections out of the recurrence ----
    # One (S*B, E) x (E, 3H) MXU matmul replaces 3*S tiny per-step matmuls;
    # b_ih is folded in once here.
    i_scr[...] = (
        jnp.dot(x_ref[...], wih_ref[...], preferred_element_type=jnp.float32)
        + bih_ref[...]
    )

    w_hh = whh_ref[...]                                    # resident (H, 3H)
    b_hh = jnp.broadcast_to(bhh_ref[...], (B, 3 * H))      # hoisted single broadcast

    def step(t, h):
        i_t = i_scr[pl.ds(t * B, B), :]                                   # (B, 3H)
        hp = jnp.dot(h, w_hh, preferred_element_type=jnp.float32) + b_hh  # (B, 3H)
        r = jax.nn.sigmoid(i_t[:, :H] + hp[:, :H])
        z = jax.nn.sigmoid(i_t[:, H:2 * H] + hp[:, H:2 * H])
        n = jnp.tanh(i_t[:, 2 * H:] + r * hp[:, 2 * H:])
        return (1.0 - z) * n + z * h

    h0 = jnp.zeros((B, H), jnp.float32)
    h_final = lax.fori_loop(0, seq_len, step, h0, unroll=True)
    h_out_ref[0] = h_final.astype(h_out_ref.dtype)


def gru_final_hidden(embedded, w_ih, w_hh, b_ih, b_hh):
    """embedded: (S, B, E) f32 -> final hidden (1, B, H) f32."""
    S, B, E = embedded.shape
    H = w_hh.shape[0]
    x2d = embedded.reshape(S * B, E)   # free layout-preserving merge of (S, B)

    kernel = functools.partial(gru_encoder_kernel, seq_len=S, batch=B)
    return pl.pallas_call(
        kernel,
        out_shape=jax.ShapeDtypeStruct((1, B, H), jnp.float32),
        in_specs=[pl.BlockSpec(memory_space=pltpu.MemorySpace.VMEM)] * 5,
        out_specs=pl.BlockSpec(memory_space=pltpu.MemorySpace.VMEM),
        scratch_shapes=[pltpu.VMEM((S * B, 3 * H), jnp.float32)],
    )(x2d, w_ih, w_hh, b_ih, b_hh)


# ------------------------------ Encoder glue -------------------------------- #
def init_encoder_params(key, input_dim, emb_dim, hid_dim):
    """Deterministic init mirroring PyTorch defaults (Embedding ~ N(0,1),
    GRU weights/biases ~ U(-1/sqrt(hid), 1/sqrt(hid))).

    Weights stored pre-transposed and gate-concatenated: (in, 3*hid),
    gate order (r | z | n) along the last (lane) dimension.
    """
    k_emb, k_wih, k_whh, k_bih, k_bhh = jax.random.split(key, 5)
    k = 1.0 / jnp.sqrt(jnp.float32(hid_dim))
    emb_table = jax.random.normal(k_emb, (input_dim, emb_dim), jnp.float32)
    w_ih = jax.random.uniform(k_wih, (emb_dim, 3 * hid_dim), jnp.float32, -k, k)
    w_hh = jax.random.uniform(k_whh, (hid_dim, 3 * hid_dim), jnp.float32, -k, k)
    b_ih = jax.random.uniform(k_bih, (1, 3 * hid_dim), jnp.float32, -k, k)
    b_hh = jax.random.uniform(k_bhh, (1, 3 * hid_dim), jnp.float32, -k, k)
    return dict(emb=emb_table, w_ih=w_ih, w_hh=w_hh, b_ih=b_ih, b_hh=b_hh)


@jax.jit
def encoder_forward(params, src):
    """src: (S, B) int32 -> hidden (1, B, H) f32 (== PyTorch Encoder.forward)."""
    # Embedding lookup (left to XLA) + eval-mode dropout (identity).
    embedded = jnp.take(params["emb"], src, axis=0)  # (S, B, E)
    return gru_final_hidden(
        embedded, params["w_ih"], params["w_hh"], params["b_ih"], params["b_hh"]
    )


# --------------------------- Pure-JAX reference ----------------------------- #
def encoder_forward_ref(params, src):
    embedded = jnp.take(params["emb"], src, axis=0)
    w_ih, w_hh, b_ih, b_hh = (
        params["w_ih"], params["w_hh"], params["b_ih"], params["b_hh"])
    B = src.shape[1]
    H = w_hh.shape[0]
    h0 = jnp.zeros((B, H), jnp.float32)

    def step(h, x):
        ip = x @ w_ih + b_ih                     # (B, 3H)
        hp = h @ w_hh + b_hh                     # (B, 3H)
        i_r, i_z, i_n = jnp.split(ip, 3, axis=-1)
        h_r, h_z, h_n = jnp.split(hp, 3, axis=-1)
        r = jax.nn.sigmoid(i_r + h_r)
        z = jax.nn.sigmoid(i_z + h_z)
        n = jnp.tanh(i_n + r * h_n)
        return (1.0 - z) * n + z * h, None

    h_final, _ = lax.scan(step, h0, embedded)
    return h_final[None]  # (1, B, H)


# ---------------------------------- main ------------------------------------ #
if __name__ == "__main__":
    INPUT_DIM = 50   # vocab size
    EMB_DIM = 32
    HID_DIM = 32
    SEQ_LEN = 8
    BATCH = 2

    key = jax.random.PRNGKey(0)
    k_params, k_src = jax.random.split(key)
    params = init_encoder_params(k_params, INPUT_DIM, EMB_DIM, HID_DIM)
    src = jax.random.randint(k_src, (SEQ_LEN, BATCH), 0, INPUT_DIM, jnp.int32)

    hidden = jax.block_until_ready(encoder_forward(params, src))
    ref = jax.block_until_ready(encoder_forward_ref(params, src))

    assert hidden.shape == (1, BATCH, HID_DIM), hidden.shape
    assert jnp.allclose(hidden, ref, atol=1e-5, rtol=1e-5), (
        "Pallas GRU mismatch vs reference")

    print("KERNEL_OK")
</pallas_src>

<mosaic_0001>
module attributes {stable_mosaic.version = 11 : i64} {
  func.func @gru_encoder_kernel(%arg0: memref<16x32xf32, #tpu.memory_space<vmem>>, %arg1: memref<32x96xf32, #tpu.memory_space<vmem>>, %arg2: memref<32x96xf32, #tpu.memory_space<vmem>>, %arg3: memref<1x96xf32, #tpu.memory_space<vmem>>, %arg4: memref<1x96xf32, #tpu.memory_space<vmem>>, %arg5: memref<1x2x32xf32, #tpu.memory_space<vmem>>, %arg6: memref<16x96xf32, #tpu.memory_space<vmem>>) attributes {dimension_semantics = [], scalar_prefetch = 0 : i64, scratch_operands = 1 : i64, tpu.core_type = #tpu.core_type<tc>} {
    %c0 = arith.constant 0 : index
    %c0_0 = arith.constant 0 : index
    %0 = vector.load %arg0[%c0, %c0_0] : memref<16x32xf32, #tpu.memory_space<vmem>>, vector<16x32xf32>
    %c0_1 = arith.constant 0 : index
    %c0_2 = arith.constant 0 : index
    %1 = vector.load %arg1[%c0_1, %c0_2] : memref<32x96xf32, #tpu.memory_space<vmem>>, vector<32x96xf32>
    %cst = arith.constant dense<0.000000e+00> : vector<16x96xf32>
    %2 = tpu.matmul %0, %1, %cst {dimension_numbers = #tpu.dot_dimension_numbers<[1], [0], [0], [1], [0, 0, 1, 1], [], []>} : vector<16x32xf32>, vector<32x96xf32>, vector<16x96xf32> -> vector<16x96xf32>
    %c0_3 = arith.constant 0 : index
    %c0_4 = arith.constant 0 : index
    %3 = vector.load %arg3[%c0_3, %c0_4] : memref<1x96xf32, #tpu.memory_space<vmem>>, vector<1x96xf32>
    %4 = vector.broadcast %3 : vector<1x96xf32> to vector<16x96xf32>
    %5 = arith.addf %2, %4 : vector<16x96xf32>
    %c0_5 = arith.constant 0 : index
    %c0_6 = arith.constant 0 : index
    %6 = vector.load %arg6[%c0_5, %c0_6] : memref<16x96xf32, #tpu.memory_space<vmem>>, vector<16x96xf32>
    tpu.vector_store %arg6[%c0_5, %c0_6], %5 {strides = array<i32>} : memref<16x96xf32, #tpu.memory_space<vmem>>, vector<16x96xf32>,
    %c0_7 = arith.constant 0 : index
    %c0_8 = arith.constant 0 : index
    %7 = vector.load %arg2[%c0_7, %c0_8] : memref<32x96xf32, #tpu.memory_space<vmem>>, vector<32x96xf32>
    %c0_9 = arith.constant 0 : index
    %c0_10 = arith.constant 0 : index
    %8 = vector.load %arg4[%c0_9, %c0_10] : memref<1x96xf32, #tpu.memory_space<vmem>>, vector<1x96xf32>
    %9 = vector.shape_cast %8 : vector<1x96xf32> to vector<1x96xf32>
    %10 = vector.broadcast %9 : vector<1x96xf32> to vector<2x96xf32>
    %cst_11 = arith.constant 0.000000e+00 : f32
    %11 = vector.broadcast %cst_11 : f32 to vector<2x32xf32>
    %c0_i32 = arith.constant 0 : i32
    %c2_i32 = arith.constant 2 : i32
    %12 = arith.muli %c0_i32, %c2_i32 : i32
    %13 = arith.index_cast %12 : i32 to index
    %c0_12 = arith.constant 0 : index
    %14 = vector.load %arg6[%13, %c0_12] : memref<16x96xf32, #tpu.memory_space<vmem>>, vector<2x96xf32>
    %cst_13 = arith.constant dense<0.000000e+00> : vector<2x96xf32>
    %15 = tpu.matmul %11, %7, %cst_13 {dimension_numbers = #tpu.dot_dimension_numbers<[1], [0], [0], [1], [0, 0, 1, 1], [], []>} : vector<2x32xf32>, vector<32x96xf32>, vector<2x96xf32> -> vector<2x96xf32>
    %16 = arith.addf %15, %10 : vector<2x96xf32>
    %17 = vector.extract_strided_slice %14 {offsets = [0, 0], sizes = [2, 32], strides = [1, 1]} : vector<2x96xf32> to vector<2x32xf32>
    %18 = vector.extract_strided_slice %16 {offsets = [0, 0], sizes = [2, 32], strides = [1, 1]} : vector<2x96xf32> to vector<2x32xf32>
    %19 = arith.addf %17, %18 : vector<2x32xf32>
    %20 = arith.negf %19 : vector<2x32xf32>
    %21 = math.exp %20 : vector<2x32xf32>
    %cst_14 = arith.constant 1.000000e+00 : f32
    %22 = vector.broadcast %cst_14 : f32 to vector<2x32xf32>
    %23 = arith.addf %22, %21 : vector<2x32xf32>
    %24 = arith.divf %22, %23 : vector<2x32xf32>
    %25 = vector.extract_strided_slice %14 {offsets = [0, 32], sizes = [2, 32], strides = [1, 1]} : vector<2x96xf32> to vector<2x32xf32>
    %26 = vector.extract_strided_slice %16 {offsets = [0, 32], sizes = [2, 32], strides = [1, 1]} : vector<2x96xf32> to vector<2x32xf32>
    %27 = arith.addf %25, %26 : vector<2x32xf32>
    %28 = arith.negf %27 : vector<2x32xf32>
    %29 = math.exp %28 : vector<2x32xf32>
    %cst_15 = arith.constant 1.000000e+00 : f32
    %30 = vector.broadcast %cst_15 : f32 to vector<2x32xf32>
    %31 = arith.addf %30, %29 : vector<2x32xf32>
    %32 = arith.divf %30, %31 : vector<2x32xf32>
    %33 = vector.extract_strided_slice %14 {offsets = [0, 64], sizes = [2, 32], strides = [1, 1]} : vector<2x96xf32> to vector<2x32xf32>
    %34 = vector.extract_strided_slice %16 {offsets = [0, 64], sizes = [2, 32], strides = [1, 1]} : vector<2x96xf32> to vector<2x32xf32>
    %35 = arith.mulf %24, %34 : vector<2x32xf32>
    %36 = arith.addf %33, %35 : vector<2x32xf32>
    %37 = math.tanh %36 : vector<2x32xf32>
    %cst_16 = arith.constant 1.000000e+00 : f32
    %38 = vector.broadcast %cst_16 : f32 to vector<2x32xf32>
    %39 = arith.subf %38, %32 : vector<2x32xf32>
    %40 = arith.mulf %39, %37 : vector<2x32xf32>
    %41 = arith.mulf %32, %11 : vector<2x32xf32>
    %42 = arith.addf %40, %41 : vector<2x32xf32>
    %c1_i32 = arith.constant 1 : i32
    %c2_i32_17 = arith.constant 2 : i32
    %43 = arith.muli %c1_i32, %c2_i32_17 : i32
    %44 = arith.index_cast %43 : i32 to index
    %c0_18 = arith.constant 0 : index
    %45 = vector.load %arg6[%44, %c0_18] : memref<16x96xf32, #tpu.memory_space<vmem>>, vector<2x96xf32>
    %cst_19 = arith.constant dense<0.000000e+00> : vector<2x96xf32>
    %46 = tpu.matmul %42, %7, %cst_19 {dimension_numbers = #tpu.dot_dimension_numbers<[1], [0], [0], [1], [0, 0, 1, 1], [], []>} : vector<2x32xf32>, vector<32x96xf32>, vector<2x96xf32> -> vector<2x96xf32>
    %47 = arith.addf %46, %10 : vector<2x96xf32>
    %48 = vector.extract_strided_slice %45 {offsets = [0, 0], sizes = [2, 32], strides = [1, 1]} : vector<2x96xf32> to vector<2x32xf32>
    %49 = vector.extract_strided_slice %47 {offsets = [0, 0], sizes = [2, 32], strides = [1, 1]} : vector<2x96xf32> to vector<2x32xf32>
    %50 = arith.addf %48, %49 : vector<2x32xf32>
    %51 = arith.negf %50 : vector<2x32xf32>
    %52 = math.exp %51 : vector<2x32xf32>
    %cst_20 = arith.constant 1.000000e+00 : f32
    %53 = vector.broadcast %cst_20 : f32 to vector<2x32xf32>
    %54 = arith.addf %53, %52 : vector<2x32xf32>
    %55 = arith.divf %53, %54 : vector<2x32xf32>
    %56 = vector.extract_strided_slice %45 {offsets = [0, 32], sizes = [2, 32], strides = [1, 1]} : vector<2x96xf32> to vector<2x32xf32>
    %57 = vector.extract_strided_slice %47 {offsets = [0, 32], sizes = [2, 32], strides = [1, 1]} : vector<2x96xf32> to vector<2x32xf32>
    %58 = arith.addf %56, %57 : vector<2x32xf32>
    %59 = arith.negf %58 : vector<2x32xf32>
    %60 = math.exp %59 : vector<2x32xf32>
    %cst_21 = arith.constant 1.000000e+00 : f32
    %61 = vector.broadcast %cst_21 : f32 to vector<2x32xf32>
    %62 = arith.addf %61, %60 : vector<2x32xf32>
    %63 = arith.divf %61, %62 : vector<2x32xf32>
    %64 = vector.extract_strided_slice %45 {offsets = [0, 64], sizes = [2, 32], strides = [1, 1]} : vector<2x96xf32> to vector<2x32xf32>
    %65 = vector.extract_strided_slice %47 {offsets = [0, 64], sizes = [2, 32], strides = [1, 1]} : vector<2x96xf32> to vector<2x32xf32>
    %66 = arith.mulf %55, %65 : vector<2x32xf32>
    %67 = arith.addf %64, %66 : vector<2x32xf32>
    %68 = math.tanh %67 : vector<2x32xf32>
    %cst_22 = arith.constant 1.000000e+00 : f32
    %69 = vector.broadcast %cst_22 : f32 to vector<2x32xf32>
    %70 = arith.subf %69, %63 : vector<2x32xf32>
    %71 = arith.mulf %70, %68 : vector<2x32xf32>
    %72 = arith.mulf %63, %42 : vector<2x32xf32>
    %73 = arith.addf %71, %72 : vector<2x32xf32>
    %c2_i32_23 = arith.constant 2 : i32
    %c2_i32_24 = arith.constant 2 : i32
    %74 = arith.muli %c2_i32_23, %c2_i32_24 : i32
    %75 = arith.index_cast %74 : i32 to index
    %c0_25 = arith.constant 0 : index
    %76 = vector.load %arg6[%75, %c0_25] : memref<16x96xf32, #tpu.memory_space<vmem>>, vector<2x96xf32>
    %cst_26 = arith.constant dense<0.000000e+00> : vector<2x96xf32>
    %77 = tpu.matmul %73, %7, %cst_26 {dimension_numbers = #tpu.dot_dimension_numbers<[1], [0], [0], [1], [0, 0, 1, 1], [], []>} : vector<2x32xf32>, vector<32x96xf32>, vector<2x96xf32> -> vector<2x96xf32>
    %78 = arith.addf %77, %10 : vector<2x96xf32>
    %79 = vector.extract_strided_slice %76 {offsets = [0, 0], sizes = [2, 32], strides = [1, 1]} : vector<2x96xf32> to vector<2x32xf32>
    %80 = vector.extract_strided_slice %78 {offsets = [0, 0], sizes = [2, 32], strides = [1, 1]} : vector<2x96xf32> to vector<2x32xf32>
    %81 = arith.addf %79, %80 : vector<2x32xf32>
    %82 = arith.negf %81 : vector<2x32xf32>
    %83 = math.exp %82 : vector<2x32xf32>
    %cst_27 = arith.constant 1.000000e+00 : f32
    %84 = vector.broadcast %cst_27 : f32 to vector<2x32xf32>
    %85 = arith.addf %84, %83 : vector<2x32xf32>
    %86 = arith.divf %84, %85 : vector<2x32xf32>
    %87 = vector.extract_strided_slice %76 {offsets = [0, 32], sizes = [2, 32], strides = [1, 1]} : vector<2x96xf32> to vector<2x32xf32>
    %88 = vector.extract_strided_slice %78 {offsets = [0, 32], sizes = [2, 32], strides = [1, 1]} : vector<2x96xf32> to vector<2x32xf32>
    %89 = arith.addf %87, %88 : vector<2x32xf32>
    %90 = arith.negf %89 : vector<2x32xf32>
    %91 = math.exp %90 : vector<2x32xf32>
    %cst_28 = arith.constant 1.000000e+00 : f32
    %92 = vector.broadcast %cst_28 : f32 to vector<2x32xf32>
    %93 = arith.addf %92, %91 : vector<2x32xf32>
    %94 = arith.divf %92, %93 : vector<2x32xf32>
    %95 = vector.extract_strided_slice %76 {offsets = [0, 64], sizes = [2, 32], strides = [1, 1]} : vector<2x96xf32> to vector<2x32xf32>
    %96 = vector.extract_strided_slice %78 {offsets = [0, 64], sizes = [2, 32], strides = [1, 1]} : vector<2x96xf32> to vector<2x32xf32>
    %97 = arith.mulf %86, %96 : vector<2x32xf32>
    %98 = arith.addf %95, %97 : vector<2x32xf32>
    %99 = math.tanh %98 : vector<2x32xf32>
    %cst_29 = arith.constant 1.000000e+00 : f32
    %100 = vector.broadcast %cst_29 : f32 to vector<2x32xf32>
    %101 = arith.subf %100, %94 : vector<2x32xf32>
    %102 = arith.mulf %101, %99 : vector<2x32xf32>
    %103 = arith.mulf %94, %73 : vector<2x32xf32>
    %104 = arith.addf %102, %103 : vector<2x32xf32>
    %c3_i32 = arith.constant 3 : i32
    %c2_i32_30 = arith.constant 2 : i32
    %105 = arith.muli %c3_i32, %c2_i32_30 : i32
    %106 = arith.index_cast %105 : i32 to index
    %c0_31 = arith.constant 0 : index
    %107 = vector.load %arg6[%106, %c0_31] : memref<16x96xf32, #tpu.memory_space<vmem>>, vector<2x96xf32>
    %cst_32 = arith.constant dense<0.000000e+00> : vector<2x96xf32>
    %108 = tpu.matmul %104, %7, %cst_32 {dimension_numbers = #tpu.dot_dimension_numbers<[1], [0], [0], [1], [0, 0, 1, 1], [], []>} : vector<2x32xf32>, vector<32x96xf32>, vector<2x96xf32> -> vector<2x96xf32>
    %109 = arith.addf %108, %10 : vector<2x96xf32>
    %110 = vector.extract_strided_slice %107 {offsets = [0, 0], sizes = [2, 32], strides = [1, 1]} : vector<2x96xf32> to vector<2x32xf32>
    %111 = vector.extract_strided_slice %109 {offsets = [0, 0], sizes = [2, 32], strides = [1, 1]} : vector<2x96xf32> to vector<2x32xf32>
    %112 = arith.addf %110, %111 : vector<2x32xf32>
    %113 = arith.negf %112 : vector<2x32xf32>
    %114 = math.exp %113 : vector<2x32xf32>
    %cst_33 = arith.constant 1.000000e+00 : f32
    %115 = vector.broadcast %cst_33 : f32 to vector<2x32xf32>
    %116 = arith.addf %115, %114 : vector<2x32xf32>
    %117 = arith.divf %115, %116 : vector<2x32xf32>
    %118 = vector.extract_strided_slice %107 {offsets = [0, 32], sizes = [2, 32], strides = [1, 1]} : vector<2x96xf32> to vector<2x32xf32>
    %119 = vector.extract_strided_slice %109 {offsets = [0, 32], sizes = [2, 32], strides = [1, 1]} : vector<2x96xf32> to vector<2x32xf32>
    %120 = arith.addf %118, %119 : vector<2x32xf32>
    %121 = arith.negf %120 : vector<2x32xf32>
    %122 = math.exp %121 : vector<2x32xf32>
    %cst_34 = arith.constant 1.000000e+00 : f32
    %123 = vector.broadcast %cst_34 : f32 to vector<2x32xf32>
    %124 = arith.addf %123, %122 : vector<2x32xf32>
    %125 = arith.divf %123, %124 : vector<2x32xf32>
    %126 = vector.extract_strided_slice %107 {offsets = [0, 64], sizes = [2, 32], strides = [1, 1]} : vector<2x96xf32> to vector<2x32xf32>
    %127 = vector.extract_strided_slice %109 {offsets = [0, 64], sizes = [2, 32], strides = [1, 1]} : vector<2x96xf32> to vector<2x32xf32>
    %128 = arith.mulf %117, %127 : vector<2x32xf32>
    %129 = arith.addf %126, %128 : vector<2x32xf32>
    %130 = math.tanh %129 : vector<2x32xf32>
    %cst_35 = arith.constant 1.000000e+00 : f32
    %131 = vector.broadcast %cst_35 : f32 to vector<2x32xf32>
    %132 = arith.subf %131, %125 : vector<2x32xf32>
    %133 = arith.mulf %132, %130 : vector<2x32xf32>
    %134 = arith.mulf %125, %104 : vector<2x32xf32>
    %135 = arith.addf %133, %134 : vector<2x32xf32>
    %c4_i32 = arith.constant 4 : i32
    %c2_i32_36 = arith.constant 2 : i32
    %136 = arith.muli %c4_i32, %c2_i32_36 : i32
    %137 = arith.index_cast %136 : i32 to index
    %c0_37 = arith.constant 0 : index
    %138 = vector.load %arg6[%137, %c0_37] : memref<16x96xf32, #tpu.memory_space<vmem>>, vector<2x96xf32>
    %cst_38 = arith.constant dense<0.000000e+00> : vector<2x96xf32>
    %139 = tpu.matmul %135, %7, %cst_38 {dimension_numbers = #tpu.dot_dimension_numbers<[1], [0], [0], [1], [0, 0, 1, 1], [], []>} : vector<2x32xf32>, vector<32x96xf32>, vector<2x96xf32> -> vector<2x96xf32>
    %140 = arith.addf %139, %10 : vector<2x96xf32>
    %141 = vector.extract_strided_slice %138 {offsets = [0, 0], sizes = [2, 32], strides = [1, 1]} : vector<2x96xf32> to vector<2x32xf32>
    %142 = vector.extract_strided_slice %140 {offsets = [0, 0], sizes = [2, 32], strides = [1, 1]} : vector<2x96xf32> to vector<2x32xf32>
    %143 = arith.addf %141, %142 : vector<2x32xf32>
    %144 = arith.negf %143 : vector<2x32xf32>
    %145 = math.exp %144 : vector<2x32xf32>
    %cst_39 = arith.constant 1.000000e+00 : f32
    %146 = vector.broadcast %cst_39 : f32 to vector<2x32xf32>
    %147 = arith.addf %146, %145 : vector<2x32xf32>
    %148 = arith.divf %146, %147 : vector<2x32xf32>
    %149 = vector.extract_strided_slice %138 {offsets = [0, 32], sizes = [2, 32], strides = [1, 1]} : vector<2x96xf32> to vector<2x32xf32>
    %150 = vector.extract_strided_slice %140 {offsets = [0, 32], sizes = [2, 32], strides = [1, 1]} : vector<2x96xf32> to vector<2x32xf32>
    %151 = arith.addf %149, %150 : vector<2x32xf32>
    %152 = arith.negf %151 : vector<2x32xf32>
    %153 = math.exp %152 : vector<2x32xf32>
    %cst_40 = arith.constant 1.000000e+00 : f32
    %154 = vector.broadcast %cst_40 : f32 to vector<2x32xf32>
    %155 = arith.addf %154, %153 : vector<2x32xf32>
    %156 = arith.divf %154, %155 : vector<2x32xf32>
    %157 = vector.extract_strided_slice %138 {offsets = [0, 64], sizes = [2, 32], strides = [1, 1]} : vector<2x96xf32> to vector<2x32xf32>
    %158 = vector.extract_strided_slice %140 {offsets = [0, 64], sizes = [2, 32], strides = [1, 1]} : vector<2x96xf32> to vector<2x32xf32>
    %159 = arith.mulf %148, %158 : vector<2x32xf32>
    %160 = arith.addf %157, %159 : vector<2x32xf32>
    %161 = math.tanh %160 : vector<2x32xf32>
    %cst_41 = arith.constant 1.000000e+00 : f32
    %162 = vector.broadcast %cst_41 : f32 to vector<2x32xf32>
    %163 = arith.subf %162, %156 : vector<2x32xf32>
    %164 = arith.mulf %163, %161 : vector<2x32xf32>
    %165 = arith.mulf %156, %135 : vector<2x32xf32>
    %166 = arith.addf %164, %165 : vector<2x32xf32>
    %c5_i32 = arith.constant 5 : i32
    %c2_i32_42 = arith.constant 2 : i32
    %167 = arith.muli %c5_i32, %c2_i32_42 : i32
    %168 = arith.index_cast %167 : i32 to index
    %c0_43 = arith.constant 0 : index
    %169 = vector.load %arg6[%168, %c0_43] : memref<16x96xf32, #tpu.memory_space<vmem>>, vector<2x96xf32>
    %cst_44 = arith.constant dense<0.000000e+00> : vector<2x96xf32>
    %170 = tpu.matmul %166, %7, %cst_44 {dimension_numbers = #tpu.dot_dimension_numbers<[1], [0], [0], [1], [0, 0, 1, 1], [], []>} : vector<2x32xf32>, vector<32x96xf32>, vector<2x96xf32> -> vector<2x96xf32>
    %171 = arith.addf %170, %10 : vector<2x96xf32>
    %172 = vector.extract_strided_slice %169 {offsets = [0, 0], sizes = [2, 32], strides = [1, 1]} : vector<2x96xf32> to vector<2x32xf32>
    %173 = vector.extract_strided_slice %171 {offsets = [0, 0], sizes = [2, 32], strides = [1, 1]} : vector<2x96xf32> to vector<2x32xf32>
    %174 = arith.addf %172, %173 : vector<2x32xf32>
    %175 = arith.negf %174 : vector<2x32xf32>
    %176 = math.exp %175 : vector<2x32xf32>
    %cst_45 = arith.constant 1.000000e+00 : f32
    %177 = vector.broadcast %cst_45 : f32 to vector<2x32xf32>
    %178 = arith.addf %177, %176 : vector<2x32xf32>
    %179 = arith.divf %177, %178 : vector<2x32xf32>
    %180 = vector.extract_strided_slice %169 {offsets = [0, 32], sizes = [2, 32], strides = [1, 1]} : vector<2x96xf32> to vector<2x32xf32>
    %181 = vector.extract_strided_slice %171 {offsets = [0, 32], sizes = [2, 32], strides = [1, 1]} : vector<2x96xf32> to vector<2x32xf32>
    %182 = arith.addf %180, %181 : vector<2x32xf32>
    %183 = arith.negf %182 : vector<2x32xf32>
    %184 = math.exp %183 : vector<2x32xf32>
    %cst_46 = arith.constant 1.000000e+00 : f32
    %185 = vector.broadcast %cst_46 : f32 to vector<2x32xf32>
    %186 = arith.addf %185, %184 : vector<2x32xf32>
    %187 = arith.divf %185, %186 : vector<2x32xf32>
    %188 = vector.extract_strided_slice %169 {offsets = [0, 64], sizes = [2, 32], strides = [1, 1]} : vector<2x96xf32> to vector<2x32xf32>
    %189 = vector.extract_strided_slice %171 {offsets = [0, 64], sizes = [2, 32], strides = [1, 1]} : vector<2x96xf32> to vector<2x32xf32>
    %190 = arith.mulf %179, %189 : vector<2x32xf32>
    %191 = arith.addf %188, %190 : vector<2x32xf32>
    %192 = math.tanh %191 : vector<2x32xf32>
    %cst_47 = arith.constant 1.000000e+00 : f32
    %193 = vector.broadcast %cst_47 : f32 to vector<2x32xf32>
    %194 = arith.subf %193, %187 : vector<2x32xf32>
    %195 = arith.mulf %194, %192 : vector<2x32xf32>
    %196 = arith.mulf %187, %166 : vector<2x32xf32>
    %197 = arith.addf %195, %196 : vector<2x32xf32>
    %c6_i32 = arith.constant 6 : i32
    %c2_i32_48 = arith.constant 2 : i32
    %198 = arith.muli %c6_i32, %c2_i32_48 : i32
    %199 = arith.index_cast %198 : i32 to index
    %c0_49 = arith.constant 0 : index
    %200 = vector.load %arg6[%199, %c0_49] : memref<16x96xf32, #tpu.memory_space<vmem>>, vector<2x96xf32>
    %cst_50 = arith.constant dense<0.000000e+00> : vector<2x96xf32>
    %201 = tpu.matmul %197, %7, %cst_50 {dimension_numbers = #tpu.dot_dimension_numbers<[1], [0], [0], [1], [0, 0, 1, 1], [], []>} : vector<2x32xf32>, vector<32x96xf32>, vector<2x96xf32> -> vector<2x96xf32>
    %202 = arith.addf %201, %10 : vector<2x96xf32>
    %203 = vector.extract_strided_slice %200 {offsets = [0, 0], sizes = [2, 32], strides = [1, 1]} : vector<2x96xf32> to vector<2x32xf32>
    %204 = vector.extract_strided_slice %202 {offsets = [0, 0], sizes = [2, 32], strides = [1, 1]} : vector<2x96xf32> to vector<2x32xf32>
    %205 = arith.addf %203, %204 : vector<2x32xf32>
    %206 = arith.negf %205 : vector<2x32xf32>
    %207 = math.exp %206 : vector<2x32xf32>
    %cst_51 = arith.constant 1.000000e+00 : f32
    %208 = vector.broadcast %cst_51 : f32 to vector<2x32xf32>
    %209 = arith.addf %208, %207 : vector<2x32xf32>
    %210 = arith.divf %208, %209 : vector<2x32xf32>
    %211 = vector.extract_strided_slice %200 {offsets = [0, 32], sizes = [2, 32], strides = [1, 1]} : vector<2x96xf32> to vector<2x32xf32>
    %212 = vector.extract_strided_slice %202 {offsets = [0, 32], sizes = [2, 32], strides = [1, 1]} : vector<2x96xf32> to vector<2x32xf32>
    %213 = arith.addf %211, %212 : vector<2x32xf32>
    %214 = arith.negf %213 : vector<2x32xf32>
    %215 = math.exp %214 : vector<2x32xf32>
    %cst_52 = arith.constant 1.000000e+00 : f32
    %216 = vector.broadcast %cst_52 : f32 to vector<2x32xf32>
    %217 = arith.addf %216, %215 : vector<2x32xf32>
    %218 = arith.divf %216, %217 : vector<2x32xf32>
    %219 = vector.extract_strided_slice %200 {offsets = [0, 64], sizes = [2, 32], strides = [1, 1]} : vector<2x96xf32> to vector<2x32xf32>
    %220 = vector.extract_strided_slice %202 {offsets = [0, 64], sizes = [2, 32], strides = [1, 1]} : vector<2x96xf32> to vector<2x32xf32>
    %221 = arith.mulf %210, %220 : vector<2x32xf32>
    %222 = arith.addf %219, %221 : vector<2x32xf32>
    %223 = math.tanh %222 : vector<2x32xf32>
    %cst_53 = arith.constant 1.000000e+00 : f32
    %224 = vector.broadcast %cst_53 : f32 to vector<2x32xf32>
    %225 = arith.subf %224, %218 : vector<2x32xf32>
    %226 = arith.mulf %225, %223 : vector<2x32xf32>
    %227 = arith.mulf %218, %197 : vector<2x32xf32>
    %228 = arith.addf %226, %227 : vector<2x32xf32>
    %c7_i32 = arith.constant 7 : i32
    %c2_i32_54 = arith.constant 2 : i32
    %229 = arith.muli %c7_i32, %c2_i32_54 : i32
    %230 = arith.index_cast %229 : i32 to index
    %c0_55 = arith.constant 0 : index
    %231 = vector.load %arg6[%230, %c0_55] : memref<16x96xf32, #tpu.memory_space<vmem>>, vector<2x96xf32>
    %cst_56 = arith.constant dense<0.000000e+00> : vector<2x96xf32>
    %232 = tpu.matmul %228, %7, %cst_56 {dimension_numbers = #tpu.dot_dimension_numbers<[1], [0], [0], [1], [0, 0, 1, 1], [], []>} : vector<2x32xf32>, vector<32x96xf32>, vector<2x96xf32> -> vector<2x96xf32>
    %233 = arith.addf %232, %10 : vector<2x96xf32>
    %234 = vector.extract_strided_slice %231 {offsets = [0, 0], sizes = [2, 32], strides = [1, 1]} : vector<2x96xf32> to vector<2x32xf32>
    %235 = vector.extract_strided_slice %233 {offsets = [0, 0], sizes = [2, 32], strides = [1, 1]} : vector<2x96xf32> to vector<2x32xf32>
    %236 = arith.addf %234, %235 : vector<2x32xf32>
    %237 = arith.negf %236 : vector<2x32xf32>
    %238 = math.exp %237 : vector<2x32xf32>
    %cst_57 = arith.constant 1.000000e+00 : f32
    %239 = vector.broadcast %cst_57 : f32 to vector<2x32xf32>
    %240 = arith.addf %239, %238 : vector<2x32xf32>
    %241 = arith.divf %239, %240 : vector<2x32xf32>
    %242 = vector.extract_strided_slice %231 {offsets = [0, 32], sizes = [2, 32], strides = [1, 1]} : vector<2x96xf32> to vector<2x32xf32>
    %243 = vector.extract_strided_slice %233 {offsets = [0, 32], sizes = [2, 32], strides = [1, 1]} : vector<2x96xf32> to vector<2x32xf32>
    %244 = arith.addf %242, %243 : vector<2x32xf32>
    %245 = arith.negf %244 : vector<2x32xf32>
    %246 = math.exp %245 : vector<2x32xf32>
    %cst_58 = arith.constant 1.000000e+00 : f32
    %247 = vector.broadcast %cst_58 : f32 to vector<2x32xf32>
    %248 = arith.addf %247, %246 : vector<2x32xf32>
    %249 = arith.divf %247, %248 : vector<2x32xf32>
    %250 = vector.extract_strided_slice %231 {offsets = [0, 64], sizes = [2, 32], strides = [1, 1]} : vector<2x96xf32> to vector<2x32xf32>
    %251 = vector.extract_strided_slice %233 {offsets = [0, 64], sizes = [2, 32], strides = [1, 1]} : vector<2x96xf32> to vector<2x32xf32>
    %252 = arith.mulf %241, %251 : vector<2x32xf32>
    %253 = arith.addf %250, %252 : vector<2x32xf32>
    %254 = math.tanh %253 : vector<2x32xf32>
    %cst_59 = arith.constant 1.000000e+00 : f32
    %255 = vector.broadcast %cst_59 : f32 to vector<2x32xf32>
    %256 = arith.subf %255, %249 : vector<2x32xf32>
    %257 = arith.mulf %256, %254 : vector<2x32xf32>
    %258 = arith.mulf %249, %228 : vector<2x32xf32>
    %259 = arith.addf %257, %258 : vector<2x32xf32>
    %c8_i32 = arith.constant 8 : i32
    %c0_60 = arith.constant 0 : index
    %c0_61 = arith.constant 0 : index
    %c0_62 = arith.constant 0 : index
    %260 = vector.load %arg5[%c0_60, %c0_61, %c0_62] : memref<1x2x32xf32, #tpu.memory_space<vmem>>, vector<1x2x32xf32>
    %261 = vector.shape_cast %260 : vector<1x2x32xf32> to vector<2x32xf32>
    %262 = vector.shape_cast %259 : vector<2x32xf32> to vector<1x2x32xf32>
    tpu.vector_store %arg5[%c0_60, %c0_61, %c0_62], %262 {strides = array<i32>} : memref<1x2x32xf32, #tpu.memory_space<vmem>>, vector<1x2x32xf32>,
    return
  }
}

</mosaic_0001>

<llo_original>
// kernel: encoder_forward.1
$region0: #{encoder_forward.1}
  #allocation0 [shape = 'u32[]', space=smem, size = 0x4, offset = 0x4, fixed_abs, tag = 'smem constant byte address 0x4 - core index']
  #allocation1 [shape = 'u32[72,128]{1,0:T(1,128)}', space=vmem, size = 0x9000, scoped, tag = 'internal scratch']
  #allocation2 [shape = 'f32[16,96]{1,0:T(8,128)}', space=vmem, size = 0x2000, scoped, tag = 'scratch operand']
  %s0 = inlined_call_operand.vmem [shape: f32[16,32], index: 0, kind: input, shape index: {}]
  %s1 = inlined_call_operand.vmem [shape: f32[32,96], index: 1, kind: input, shape index: {}]
  %s2 = inlined_call_operand.vmem [shape: f32[32,96], index: 2, kind: input, shape index: {}]
  %s3 = inlined_call_operand.vmem [shape: f32[1,96], index: 3, kind: input, shape index: {}]
  %s4 = inlined_call_operand.vmem [shape: f32[1,96], index: 4, kind: input, shape index: {}]
  %s5 = inlined_call_operand.hbm [shape: f32[1,2,32], index: 5, kind: output, shape index: {}]
  %s6 = sld [smem:[#allocation0]]
  $region30: #{encoder_forward.1} parent=0
    _
  %s8 = ssub.s32 1, %s6
  %s9 = scalar_select 0, %s8, %s6
  $region1: #{encoder_forward.1} parent=0
    #allocation3 [shape = 'u8[1024]{0}', space=vmem, size = 0x400, scoped, tag = 'output window, operand 0, single buffered']
    #allocation4 [shape = 's32[1]{0}', space=sflag, size = 0x4, scoped, tag = 'scoped memory for encoder_forward.1']
    %10 = vsyncpa [#allocation4], 0
    // Predicated region
    $region2: #{encoder_forward.1} parent=1 // pred_check
      _
    $region3: #{encoder_forward.1} parent=1 // pred_check_branch
      %12 = sbr.rel (0) target = $region5
    $region4: #{encoder_forward.1} parent=1 // pred_region
      _
    $region5: #{encoder_forward.1} parent=1 // pred_fallthru
      _
    // Predicated region
    $region6: #{encoder_forward.1} parent=1 // pred_check
      _
    $region7: #{encoder_forward.1} parent=1 // pred_check_branch
      %14 = sbr.rel (0) target = $region9
    $region8: #{encoder_forward.1} parent=1 // pred_region
      _
    $region9: #{encoder_forward.1} parent=1 // pred_fallthru
      _
    // Predicated region
    $region10: #{encoder_forward.1} parent=1 // pred_check
      _
    $region11: #{encoder_forward.1} parent=1 // pred_check_branch
      %16 = sbr.rel (0) target = $region13
    $region12: #{encoder_forward.1} parent=1 // pred_region
      _
    $region13: #{encoder_forward.1} parent=1 // pred_fallthru
      _
    // Predicated region
    $region14: #{encoder_forward.1} parent=1 // pred_check
      _
    $region15: #{encoder_forward.1} parent=1 // pred_check_branch
      %18 = sbr.rel (0) target = $region17
    $region16: #{encoder_forward.1} parent=1 // pred_region
      _
    $region17: #{encoder_forward.1} parent=1 // pred_fallthru
      _
    // Predicated region
    $region18: #{encoder_forward.1} parent=1 // pred_check
      _
    $region19: #{encoder_forward.1} parent=1 // pred_check_branch
      %20 = sbr.rel (0) target = $region21
    $region20: #{encoder_forward.1} parent=1 // pred_region
      _
    $region21: #{encoder_forward.1} parent=1 // pred_fallthru
      _
    %v21 = vld [vmem:[%s0] sm:$0xff]
    %v22 = vld [vmem:[%s0 + $0x8] sm:$0xff]
    %v23 = vld [vmem:[%s1] sm:$0xff]
    %v24 = vld [vmem:[%s1 + $0x8] sm:$0xff]
    %v25 = vld [vmem:[%s1 + $0x10] sm:$0xff]
    %v26 = vld [vmem:[%s1 + $0x18] sm:$0xff]
    %v27 = vld [vmem:[%s3] sm:$0x1]
    %v29 = vperm.slane %v27, 0
    %vm31 = vcmask 261120
    %v33 = vsel %vm31, %v21, 0
    %v36 = vsel %vm31, %v22, 0
    %38 = vmatpush.msra.mxu0 0.0
    %39 = vmatpush.msra.mxu0 0.0
    %40 = vmatpush.msra.mxu0 0.0
    %41 = vmatpush.msra.mxu0 0.0
    %42 = vmatpush.msra.mxu0 0.0
    %43 = vmatpush.msra.mxu0 0.0
    %44 = vmatpush.msra.mxu0 0.0
    %45 = vmatpush.msra.mxu0 0.0
    %46 = vmatpush.msra.mxu0 0.0
    %47 = vmatpush.msra.mxu0 0.0
    %48 = vmatpush.msra.mxu0 0.0
    %49 = vmatpush.msra.mxu0 0.0
    %50 = vmatpush.msra.mxu0 %v26
    %51 = vmatpush.msra.mxu0 %v25
    %52 = vmatpush.msra.mxu0 %v24
    %53 = vmatpush.msra.mxu0 %v23
    %54 = vmatmul.f32.gmra.mxu0 %v33
    %v55 = vpop.f32.mrf.mxu0
    %v56 = vadd.f32 %v29, %v55
    %57 = vmatmul.f32.gmra.mxu0 %v36
    %v58 = vpop.f32.mrf.mxu0
    %v59 = vadd.f32 %v29, %v58
    %60 = vdwg.mxu0
    %vm61 = vcmask 785408
    %62 = vst.msk [vmem:[#allocation2] sm:$0xff] %vm61, %v56
    %63 = vst.msk [vmem:[#allocation2 + $0x8] sm:$0xff] %vm61, %v59
    %v64 = vld [vmem:[%s2] sm:$0xff]
    %v65 = vld [vmem:[%s2 + $0x8] sm:$0xff]
    %v66 = vld [vmem:[%s2 + $0x10] sm:$0xff]
    %v67 = vld [vmem:[%s2 + $0x18] sm:$0xff]
    %v68 = vld [vmem:[%s4] sm:$0x1]
    %v70 = vperm.slane %v68, 0
    %v72 = vld [vmem:[#allocation2] sm:$0x3]
    %v74 = vsel %vm31, 0.0, 0
    %76 = vmatpush.msra.mxu0 0.0
    %77 = vmatpush.msra.mxu0 0.0
    %78 = vmatpush.msra.mxu0 0.0
    %79 = vmatpush.msra.mxu0 0.0
    %80 = vmatpush.msra.mxu0 0.0
    %81 = vmatpush.msra.mxu0 0.0
    %82 = vmatpush.msra.mxu0 0.0
    %83 = vmatpush.msra.mxu0 0.0
    %84 = vmatpush.msra.mxu0 0.0
    %85 = vmatpush.msra.mxu0 0.0
    %86 = vmatpush.msra.mxu0 0.0
    %87 = vmatpush.msra.mxu0 0.0
    %88 = vmatpush.msra.mxu0 %v67
    %89 = vmatpush.msra.mxu0 %v66
    %90 = vmatpush.msra.mxu0 %v65
    %91 = vmatpush.msra.mxu0 %v64
    %92 = vmatmul.f32.gmra.mxu0 %v74
    %v93 = vpop.f32.mrf.mxu0
    %v94 = vadd.f32 %v70, %v93
    %95 = vdwg.mxu0
    %v96 = vadd.f32 %v72, %v94
    %v97 = vxor.u32 %v96, 2147483648
    %v98 = vmul.f32 %v97, 1.442695
    %v99 = vpow.pop %v98
    %v100 = vadd.f32 %v99, 1.0
    %v101 = vrcp.pop %v100
    %v102 = vmul.f32 %v100, %v101
    %v103 = vsub.f32 1.0, %v102
    %v104 = vmul.f32 %v101, %v103
    %v105 = vadd.f32 %v101, %v104
    %vm106 = vweird.f32 %v100
    %vm107 = vweird.f32 %v101
    %vm108 = vmor %vm106, %vm107
    %v109 = vsel %vm108, %v101, %v105
    %v110 = vand.u32 2147483647, %v100
    %vm111 = vcmp.eq.f32.partialorder %v110, 8.507059e+37
    %v112 = vand.u32 %v100, 2147483648
    %v113 = vor.u32 1.1754944e-38, %v112
    %v114 = vsel %vm111, %v113, %v109
    %v115 = vmul.f32 1.0, %v114
    %117 = vrot.lane.b32.xlu0 %v94, 64
    %v118 = vpop.permute.xlu0 %117
    %v120 = vmul.f32 %v115, %v118
    %122 = vrot.lane.b32.xlu0 %v120, 64
    %v123 = vpop.permute.xlu0 %122
    %v125 = vadd.f32 %v72, %v123
    %v126 = vtanh.pop %v125
    %v127 = vsub.f32 1.0, %v115
    %129 = vrot.lane.b32.xlu0 %v126, 96
    %v130 = vpop.permute.xlu0 %129
    %v132 = vmul.f32 %v127, %v130
    %v133 = vmul.f32 %v115, 0.0
    %v134 = vadd.f32 %v132, %v133
    %v135 = vld [vmem:[#allocation2 + $0x2] sm:$0x3]
    %137 = vrot.lane.b32.xlu0 %v134, 96
    %v138 = vpop.permute.xlu0 %137
    %v139 = vsel %vm31, %v138, 0
    %141 = vmatpush.msra.mxu0 0.0
    %142 = vmatpush.msra.mxu0 0.0
    %143 = vmatpush.msra.mxu0 0.0
    %144 = vmatpush.msra.mxu0 0.0
    %145 = vmatpush.msra.mxu0 0.0
    %146 = vmatpush.msra.mxu0 0.0
    %147 = vmatpush.msra.mxu0 0.0
    %148 = vmatpush.msra.mxu0 0.0
    %149 = vmatpush.msra.mxu0 0.0
    %150 = vmatpush.msra.mxu0 0.0
    %151 = vmatpush.msra.mxu0 0.0
    %152 = vmatpush.msra.mxu0 0.0
    %153 = vmatpush.msra.mxu0 %v67
    %154 = vmatpush.msra.mxu0 %v66
    %155 = vmatpush.msra.mxu0 %v65
    %156 = vmatpush.msra.mxu0 %v64
    %157 = vmatmul.f32.gmra.mxu0 %v139
    %v158 = vpop.f32.mrf.mxu0
    %v159 = vadd.f32 %v70, %v158
    %160 = vdwg.mxu0
    %v161 = vadd.f32 %v135, %v159
    %v162 = vxor.u32 %v161, 2147483648
    %v163 = vmul.f32 %v162, 1.442695
    %v164 = vpow.pop %v163
    %v165 = vadd.f32 %v164, 1.0
    %v166 = vrcp.pop %v165
    %v167 = vmul.f32 %v165, %v166
    %v168 = vsub.f32 1.0, %v167
    %v169 = vmul.f32 %v166, %v168
    %v170 = vadd.f32 %v166, %v169
    %vm171 = vweird.f32 %v165
    %vm172 = vweird.f32 %v166
    %vm173 = vmor %vm171, %vm172
    %v174 = vsel %vm173, %v166, %v170
    %v175 = vand.u32 2147483647, %v165
    %vm176 = vcmp.eq.f32.partialorder %v175, 8.507059e+37
    %v177 = vand.u32 %v165, 2147483648
    %v178 = vor.u32 1.1754944e-38, %v177
    %v179 = vsel %vm176, %v178, %v174
    %v180 = vmul.f32 1.0, %v179
    %182 = vrot.lane.b32.xlu0 %v159, 64
    %v183 = vpop.permute.xlu0 %182
    %v185 = vmul.f32 %v180, %v183
    %187 = vrot.lane.b32.xlu0 %v185, 64
    %v188 = vpop.permute.xlu0 %187
    %v190 = vadd.f32 %v135, %v188
    %v191 = vtanh.pop %v190
    %v192 = vsub.f32 1.0, %v180
    %194 = vrot.lane.b32.xlu0 %v191, 96
    %v195 = vpop.permute.xlu0 %194
    %v197 = vmul.f32 %v192, %v195
    %v198 = vmul.f32 %v180, %v134
    %v199 = vadd.f32 %v197, %v198
    %v200 = vld [vmem:[#allocation2 + $0x4] sm:$0x3]
    %202 = vrot.lane.b32.xlu0 %v199, 96
    %v203 = vpop.permute.xlu0 %202
    %v204 = vsel %vm31, %v203, 0
    %206 = vmatpush.msra.mxu0 0.0
    %207 = vmatpush.msra.mxu0 0.0
    %208 = vmatpush.msra.mxu0 0.0
    %209 = vmatpush.msra.mxu0 0.0
    %210 = vmatpush.msra.mxu0 0.0
    %211 = vmatpush.msra.mxu0 0.0
    %212 = vmatpush.msra.mxu0 0.0
    %213 = vmatpush.msra.mxu0 0.0
    %214 = vmatpush.msra.mxu0 0.0
    %215 = vmatpush.msra.mxu0 0.0
    %216 = vmatpush.msra.mxu0 0.0
    %217 = vmatpush.msra.mxu0 0.0
    %218 = vmatpush.msra.mxu0 %v67
    %219 = vmatpush.msra.mxu0 %v66
    %220 = vmatpush.msra.mxu0 %v65
    %221 = vmatpush.msra.mxu0 %v64
    %222 = vmatmul.f32.gmra.mxu0 %v204
    %v223 = vpop.f32.mrf.mxu0
    %v224 = vadd.f32 %v70, %v223
    %225 = vdwg.mxu0
    %v226 = vadd.f32 %v200, %v224
    %v227 = vxor.u32 %v226, 2147483648
    %v228 = vmul.f32 %v227, 1.442695
    %v229 = vpow.pop %v228
    %v230 = vadd.f32 %v229, 1.0
    %v231 = vrcp.pop %v230
    %v232 = vmul.f32 %v230, %v231
    %v233 = vsub.f32 1.0, %v232
    %v234 = vmul.f32 %v231, %v233
    %v235 = vadd.f32 %v231, %v234
    %vm236 = vweird.f32 %v230
    %vm237 = vweird.f32 %v231
    %vm238 = vmor %vm236, %vm237
    %v239 = vsel %vm238, %v231, %v235
    %v240 = vand.u32 2147483647, %v230
    %vm241 = vcmp.eq.f32.partialorder %v240, 8.507059e+37
    %v242 = vand.u32 %v230, 2147483648
    %v243 = vor.u32 1.1754944e-38, %v242
    %v244 = vsel %vm241, %v243, %v239
    %v245 = vmul.f32 1.0, %v244
    %247 = vrot.lane.b32.xlu0 %v224, 64
    %v248 = vpop.permute.xlu0 %247
    %v250 = vmul.f32 %v245, %v248
    %252 = vrot.lane.b32.xlu0 %v250, 64
    %v253 = vpop.permute.xlu0 %252
    %v255 = vadd.f32 %v200, %v253
    %v256 = vtanh.pop %v255
    %v257 = vsub.f32 1.0, %v245
    %259 = vrot.lane.b32.xlu0 %v256, 96
    %v260 = vpop.permute.xlu0 %259
    %v262 = vmul.f32 %v257, %v260
    %v263 = vmul.f32 %v245, %v199
    %v264 = vadd.f32 %v262, %v263
    %v265 = vld [vmem:[#allocation2 + $0x6] sm:$0x3]
    %267 = vrot.lane.b32.xlu0 %v264, 96
    %v268 = vpop.permute.xlu0 %267
    %v269 = vsel %vm31, %v268, 0
    %271 = vmatpush.msra.mxu0 0.0
    %272 = vmatpush.msra.mxu0 0.0
    %273 = vmatpush.msra.mxu0 0.0
    %274 = vmatpush.msra.mxu0 0.0
    %275 = vmatpush.msra.mxu0 0.0
    %276 = vmatpush.msra.mxu0 0.0
    %277 = vmatpush.msra.mxu0 0.0
    %278 = vmatpush.msra.mxu0 0.0
    %279 = vmatpush.msra.mxu0 0.0
    %280 = vmatpush.msra.mxu0 0.0
    %281 = vmatpush.msra.mxu0 0.0
    %282 = vmatpush.msra.mxu0 0.0
    %283 = vmatpush.msra.mxu0 %v67
    %284 = vmatpush.msra.mxu0 %v66
    %285 = vmatpush.msra.mxu0 %v65
    %286 = vmatpush.msra.mxu0 %v64
    %287 = vmatmul.f32.gmra.mxu0 %v269
    %v288 = vpop.f32.mrf.mxu0
    %v289 = vadd.f32 %v70, %v288
    %290 = vdwg.mxu0
    %v291 = vadd.f32 %v265, %v289
    %v292 = vxor.u32 %v291, 2147483648
    %v293 = vmul.f32 %v292, 1.442695
    %v294 = vpow.pop %v293
    %v295 = vadd.f32 %v294, 1.0
    %v296 = vrcp.pop %v295
    %v297 = vmul.f32 %v295, %v296
    %v298 = vsub.f32 1.0, %v297
    %v299 = vmul.f32 %v296, %v298
    %v300 = vadd.f32 %v296, %v299
    %vm301 = vweird.f32 %v295
    %vm302 = vweird.f32 %v296
    %vm303 = vmor %vm301, %vm302
    %v304 = vsel %vm303, %v296, %v300
    %v305 = vand.u32 2147483647, %v295
    %vm306 = vcmp.eq.f32.partialorder %v305, 8.507059e+37
    %v307 = vand.u32 %v295, 2147483648
    %v308 = vor.u32 1.1754944e-38, %v307
    %v309 = vsel %vm306, %v308, %v304
    %v310 = vmul.f32 1.0, %v309
    %312 = vrot.lane.b32.xlu0 %v289, 64
    %v313 = vpop.permute.xlu0 %312
    %v315 = vmul.f32 %v310, %v313
    %317 = vrot.lane.b32.xlu0 %v315, 64
    %v318 = vpop.permute.xlu0 %317
    %v320 = vadd.f32 %v265, %v318
    %v321 = vtanh.pop %v320
    %v322 = vsub.f32 1.0, %v310
    %324 = vrot.lane.b32.xlu0 %v321, 96
    %v325 = vpop.permute.xlu0 %324
    %v327 = vmul.f32 %v322, %v325
    %v328 = vmul.f32 %v310, %v264
    %v329 = vadd.f32 %v327, %v328
    %v330 = vld [vmem:[#allocation2 + $0x8] sm:$0x3]
    %332 = vrot.lane.b32.xlu0 %v329, 96
    %v333 = vpop.permute.xlu0 %332
    %v334 = vsel %vm31, %v333, 0
    %336 = vmatpush.msra.mxu0 0.0
    %337 = vmatpush.msra.mxu0 0.0
    %338 = vmatpush.msra.mxu0 0.0
    %339 = vmatpush.msra.mxu0 0.0
    %340 = vmatpush.msra.mxu0 0.0
    %341 = vmatpush.msra.mxu0 0.0
    %342 = vmatpush.msra.mxu0 0.0
    %343 = vmatpush.msra.mxu0 0.0
    %344 = vmatpush.msra.mxu0 0.0
    %345 = vmatpush.msra.mxu0 0.0
    %346 = vmatpush.msra.mxu0 0.0
    %347 = vmatpush.msra.mxu0 0.0
    %348 = vmatpush.msra.mxu0 %v67
    %349 = vmatpush.msra.mxu0 %v66
    %350 = vmatpush.msra.mxu0 %v65
    %351 = vmatpush.msra.mxu0 %v64
    %352 = vmatmul.f32.gmra.mxu0 %v334
    %v353 = vpop.f32.mrf.mxu0
    %v354 = vadd.f32 %v70, %v353
    %355 = vdwg.mxu0
    %v356 = vadd.f32 %v330, %v354
    %v357 = vxor.u32 %v356, 2147483648
    %v358 = vmul.f32 %v357, 1.442695
    %v359 = vpow.pop %v358
    %v360 = vadd.f32 %v359, 1.0
    %v361 = vrcp.pop %v360
    %v362 = vmul.f32 %v360, %v361
    %v363 = vsub.f32 1.0, %v362
    %v364 = vmul.f32 %v361, %v363
    %v365 = vadd.f32 %v361, %v364
    %vm366 = vweird.f32 %v360
    %vm367 = vweird.f32 %v361
    %vm368 = vmor %vm366, %vm367
    %v369 = vsel %vm368, %v361, %v365
    %v370 = vand.u32 2147483647, %v360
    %vm371 = vcmp.eq.f32.partialorder %v370, 8.507059e+37
    %v372 = vand.u32 %v360, 2147483648
    %v373 = vor.u32 1.1754944e-38, %v372
    %v374 = vsel %vm371, %v373, %v369
    %v375 = vmul.f32 1.0, %v374
    %377 = vrot.lane.b32.xlu0 %v354, 64
    %v378 = vpop.permute.xlu0 %377
    %v380 = vmul.f32 %v375, %v378
    %382 = vrot.lane.b32.xlu0 %v380, 64
    %v383 = vpop.permute.xlu0 %382
    %v385 = vadd.f32 %v330, %v383
    %v386 = vtanh.pop %v385
    %v387 = vsub.f32 1.0, %v375
    %389 = vrot.lane.b32.xlu0 %v386, 96
    %v390 = vpop.permute.xlu0 %389
    %v392 = vmul.f32 %v387, %v390
    %v393 = vmul.f32 %v375, %v329
    %v394 = vadd.f32 %v392, %v393
    %v395 = vld [vmem:[#allocation2 + $0xa] sm:$0x3]
    %397 = vrot.lane.b32.xlu0 %v394, 96
    %v398 = vpop.permute.xlu0 %397
    %v399 = vsel %vm31, %v398, 0
    %401 = vmatpush.msra.mxu0 0.0
    %402 = vmatpush.msra.mxu0 0.0
    %403 = vmatpush.msra.mxu0 0.0
    %404 = vmatpush.msra.mxu0 0.0
    %405 = vmatpush.msra.mxu0 0.0
    %406 = vmatpush.msra.mxu0 0.0
    %407 = vmatpush.msra.mxu0 0.0
    %408 = vmatpush.msra.mxu0 0.0
    %409 = vmatpush.msra.mxu0 0.0
    %410 = vmatpush.msra.mxu0 0.0
    %411 = vmatpush.msra.mxu0 0.0
    %412 = vmatpush.msra.mxu0 0.0
    %413 = vmatpush.msra.mxu0 %v67
    %414 = vmatpush.msra.mxu0 %v66
    %415 = vmatpush.msra.mxu0 %v65
    %416 = vmatpush.msra.mxu0 %v64
    %417 = vmatmul.f32.gmra.mxu0 %v399
    %v418 = vpop.f32.mrf.mxu0
    %v419 = vadd.f32 %v70, %v418
    %420 = vdwg.mxu0
    %v421 = vadd.f32 %v395, %v419
    %v422 = vxor.u32 %v421, 2147483648
    %v423 = vmul.f32 %v422, 1.442695
    %v424 = vpow.pop %v423
    %v425 = vadd.f32 %v424, 1.0
    %v426 = vrcp.pop %v425
    %v427 = vmul.f32 %v425, %v426
    %v428 = vsub.f32 1.0, %v427
    %v429 = vmul.f32 %v426, %v428
    %v430 = vadd.f32 %v426, %v429
    %vm431 = vweird.f32 %v425
    %vm432 = vweird.f32 %v426
    %vm433 = vmor %vm431, %vm432
    %v434 = vsel %vm433, %v426, %v430
    %v435 = vand.u32 2147483647, %v425
    %vm436 = vcmp.eq.f32.partialorder %v435, 8.507059e+37
    %v437 = vand.u32 %v425, 2147483648
    %v438 = vor.u32 1.1754944e-38, %v437
    %v439 = vsel %vm436, %v438, %v434
    %v440 = vmul.f32 1.0, %v439
    %442 = vrot.lane.b32.xlu0 %v419, 64
    %v443 = vpop.permute.xlu0 %442
    %v445 = vmul.f32 %v440, %v443
    %447 = vrot.lane.b32.xlu0 %v445, 64
    %v448 = vpop.permute.xlu0 %447
    %v450 = vadd.f32 %v395, %v448
    %v451 = vtanh.pop %v450
    %v452 = vsub.f32 1.0, %v440
    %454 = vrot.lane.b32.xlu0 %v451, 96
    %v455 = vpop.permute.xlu0 %454
    %v457 = vmul.f32 %v452, %v455
    %v458 = vmul.f32 %v440, %v394
    %v459 = vadd.f32 %v457, %v458
    %v460 = vld [vmem:[#allocation2 + $0xc] sm:$0x3]
    %462 = vrot.lane.b32.xlu0 %v459, 96
    %v463 = vpop.permute.xlu0 %462
    %v464 = vsel %vm31, %v463, 0
    %466 = vmatpush.msra.mxu0 0.0
    %467 = vmatpush.msra.mxu0 0.0
    %468 = vmatpush.msra.mxu0 0.0
    %469 = vmatpush.msra.mxu0 0.0
    %470 = vmatpush.msra.mxu0 0.0
    %471 = vmatpush.msra.mxu0 0.0
    %472 = vmatpush.msra.mxu0 0.0
    %473 = vmatpush.msra.mxu0 0.0
    %474 = vmatpush.msra.mxu0 0.0
    %475 = vmatpush.msra.mxu0 0.0
    %476 = vmatpush.msra.mxu0 0.0
    %477 = vmatpush.msra.mxu0 0.0
    %478 = vmatpush.msra.mxu0 %v67
    %479 = vmatpush.msra.mxu0 %v66
    %480 = vmatpush.msra.mxu0 %v65
    %481 = vmatpush.msra.mxu0 %v64
    %482 = vmatmul.f32.gmra.mxu0 %v464
    %v483 = vpop.f32.mrf.mxu0
    %v484 = vadd.f32 %v70, %v483
    %485 = vdwg.mxu0
    %v486 = vadd.f32 %v460, %v484
    %v487 = vxor.u32 %v486, 2147483648
    %v488 = vmul.f32 %v487, 1.442695
    %v489 = vpow.pop %v488
    %v490 = vadd.f32 %v489, 1.0
    %v491 = vrcp.pop %v490
    %v492 = vmul.f32 %v490, %v491
    %v493 = vsub.f32 1.0, %v492
    %v494 = vmul.f32 %v491, %v493
    %v495 = vadd.f32 %v491, %v494
    %vm496 = vweird.f32 %v490
    %vm497 = vweird.f32 %v491
    %vm498 = vmor %vm496, %vm497
    %v499 = vsel %vm498, %v491, %v495
    %v500 = vand.u32 2147483647, %v490
    %vm501 = vcmp.eq.f32.partialorder %v500, 8.507059e+37
    %v502 = vand.u32 %v490, 2147483648
    %v503 = vor.u32 1.1754944e-38, %v502
    %v504 = vsel %vm501, %v503, %v499
    %v505 = vmul.f32 1.0, %v504
    %507 = vrot.lane.b32.xlu0 %v484, 64
    %v508 = vpop.permute.xlu0 %507
    %v510 = vmul.f32 %v505, %v508
    %512 = vrot.lane.b32.xlu0 %v510, 64
    %v513 = vpop.permute.xlu0 %512
    %v515 = vadd.f32 %v460, %v513
    %v516 = vtanh.pop %v515
    %v517 = vsub.f32 1.0, %v505
    %519 = vrot.lane.b32.xlu0 %v516, 96
    %v520 = vpop.permute.xlu0 %519
    %v522 = vmul.f32 %v517, %v520
    %v523 = vmul.f32 %v505, %v459
    %v524 = vadd.f32 %v522, %v523
    %v525 = vld [vmem:[#allocation2 + $0xe] sm:$0x3]
    %527 = vrot.lane.b32.xlu0 %v524, 96
    %v528 = vpop.permute.xlu0 %527
    %v529 = vsel %vm31, %v528, 0
    %531 = vmatpush.msra.mxu0 0.0
    %532 = vmatpush.msra.mxu0 0.0
    %533 = vmatpush.msra.mxu0 0.0
    %534 = vmatpush.msra.mxu0 0.0
    %535 = vmatpush.msra.mxu0 0.0
    %536 = vmatpush.msra.mxu0 0.0
    %537 = vmatpush.msra.mxu0 0.0
    %538 = vmatpush.msra.mxu0 0.0
    %539 = vmatpush.msra.mxu0 0.0
    %540 = vmatpush.msra.mxu0 0.0
    %541 = vmatpush.msra.mxu0 0.0
    %542 = vmatpush.msra.mxu0 0.0
    %543 = vmatpush.msra.mxu0 %v67
    %544 = vmatpush.msra.mxu0 %v66
    %545 = vmatpush.msra.mxu0 %v65
    %546 = vmatpush.msra.mxu0 %v64
    %547 = vmatmul.f32.gmra.mxu0 %v529
    %v548 = vpop.f32.mrf.mxu0
    %v549 = vadd.f32 %v70, %v548
    %550 = vdwg.mxu0
    %v551 = vadd.f32 %v525, %v549
    %v552 = vxor.u32 %v551, 2147483648
    %v553 = vmul.f32 %v552, 1.442695
    %v554 = vpow.pop %v553
    %v555 = vadd.f32 %v554, 1.0
    %v556 = vrcp.pop %v555
    %v557 = vmul.f32 %v555, %v556
    %v558 = vsub.f32 1.0, %v557
    %v559 = vmul.f32 %v556, %v558
    %v560 = vadd.f32 %v556, %v559
    %vm561 = vweird.f32 %v555
    %vm562 = vweird.f32 %v556
    %vm563 = vmor %vm561, %vm562
    %v564 = vsel %vm563, %v556, %v560
    %v565 = vand.u32 2147483647, %v555
    %vm566 = vcmp.eq.f32.partialorder %v565, 8.507059e+37
    %v567 = vand.u32 %v555, 2147483648
    %v568 = vor.u32 1.1754944e-38, %v567
    %v569 = vsel %vm566, %v568, %v564
    %v570 = vmul.f32 1.0, %v569
    %572 = vrot.lane.b32.xlu0 %v549, 64
    %v573 = vpop.permute.xlu0 %572
    %v575 = vmul.f32 %v570, %v573
    %577 = vrot.lane.b32.xlu0 %v575, 64
    %v578 = vpop.permute.xlu0 %577
    %v580 = vadd.f32 %v525, %v578
    %v581 = vtanh.pop %v580
    %v582 = vsub.f32 1.0, %v570
    %584 = vrot.lane.b32.xlu0 %v581, 96
    %v585 = vpop.permute.xlu0 %584
    %v587 = vmul.f32 %v582, %v585
    %v588 = vmul.f32 %v570, %v524
    %v589 = vadd.f32 %v587, %v588
    %591 = vrot.lane.b32.xlu0 %v589, 96
    %v592 = vpop.permute.xlu0 %591
    %vm594 = vcmask 254976
    %595 = vst.msk [vmem:[#allocation3] sm:$0x3] %vm594, %v592
    // Predicated region
    $region22: #{encoder_forward.1} parent=1 // pred_check
      _
    $region23: #{encoder_forward.1} parent=1 // pred_check_branch
      %597 = sbr.rel (0) target = $region25
    $region24: #{encoder_forward.1} parent=1 // pred_region
      %599 = vsyncadd [#allocation4], 0
      %s601 = sshll.u32 [#allocation3], 4
      %s602 = int_to_ptr.vmem [resolvable:$true] %s601
      %s603 = sshll.u32 %s5, 4
      %s604 = int_to_ptr.hbm [resolvable:$true] %s603
      %606 = dma.vmem_to_hbm [thread:$0]  %s602, 32, %s604, [#allocation4]
    $region25: #{encoder_forward.1} parent=1 // pred_fallthru
      _
    // Predicated region
    $region26: #{encoder_forward.1} parent=1 // pred_check
      _
    $region27: #{encoder_forward.1} parent=1 // pred_check_branch
      %608 = sbr.rel (0) target = $region29
    $region28: #{encoder_forward.1} parent=1 // pred_region
      %610 = dma.done [#allocation4], 32
    $region29: #{encoder_forward.1} parent=1 // pred_fallthru
      _
    %611 = vsyncpa [#allocation4], 1

</llo_original>
